<compile_context>
chip_gen: v5e
topology: v5e:2x2
jax: 0.10.0
libtpu: 0.0.40
codegen_flags: <defaults>
</compile_context>

<pallas_src>
import functools

import jax
import jax.numpy as jnp
from jax.experimental import pallas as pl
from jax.experimental.pallas import tpu as pltpu


_LANE_POOL_CHUNK = 512     # lanes per pooling chunk (bounds the f32 upcast temp)
_SUBLANE_POOL_CHUNK = 256  # sublanes per pooling chunk (channels-last layout)


# ----------------------------------------------------------------------------
# Hardware queries (trace-time, defensive).
# ----------------------------------------------------------------------------
def _vmem_capacity_bytes():
    try:
        cap = int(pltpu.get_tpu_info().vmem_capacity_bytes)
        if cap > 0:
            return cap
    except Exception:
        pass
    return 64 << 20  # conservative default (v7x physical VMEM)


def _num_tensorcores():
    try:
        d = jax.devices()[0]
        for attr in ("num_cores", "core_count"):
            v = getattr(d, attr, None)
            if v is not None and int(v) > 0:
                return int(v)
        if "v7" in str(getattr(d, "device_kind", "")).lower():
            return 2
    except Exception:
        pass
    return 1


def _pick_batch_block(n, per_batch_bytes, target_block_bytes, num_cores):
    """Largest batch block whose tile is ~target_block_bytes, adjusted so multi-
    TensorCore parts see an even (>= 2 per core) number of grid steps."""
    b = max(1, int(target_block_bytes) // max(int(per_batch_bytes), 1))
    b = min(b, n)
    if num_cores > 1 and n >= num_cores:
        min_steps = min(n, 2 * num_cores)
        steps = num_cores * pl.cdiv(max(pl.cdiv(n, b), min_steps), num_cores)
        for _ in range(4):  # nudge until the realized step count is balanced
            bb = pl.cdiv(n, min(steps, n))
            real = pl.cdiv(n, bb)
            if real >= n or real % num_cores == 0:
                break
            steps += num_cores
        b = pl.cdiv(n, min(steps, n))
    return max(1, int(b))


# ----------------------------------------------------------------------------
# Main (fully fused) kernel.
# ----------------------------------------------------------------------------
def _mean_f32(x_ref, axis, chunk):
    """Mean of x_ref over `axis` (2 = lanes, 1 = sublanes), accumulated in f32,
    upcasting at most `chunk`-wide slices at a time to bound the temporary."""
    shape = x_ref.shape
    length = shape[axis]
    b, c = (shape[0], shape[1]) if axis == 2 else (shape[0], shape[2])
    acc = jnp.zeros((b, c), jnp.float32)
    start = 0
    while start < length:  # static (trace-time) chunking
        size = min(chunk, length - start)
        if axis == 2:
            part = x_ref[:, :, pl.ds(start, size)].astype(jnp.float32)
            acc = acc + jnp.sum(part, axis=2)
        else:
            part = x_ref[:, pl.ds(start, size), :].astype(jnp.float32)
            acc = acc + jnp.sum(part, axis=1)
        start += size
    return acc * (1.0 / float(length))


def _se_kernel(x_ref, w1t_ref, b1_ref, w2t_ref, b2_ref, o_ref, *, channels_last):
    # x_ref: (B_BLK, C, HW) when channels_last=False, else (B_BLK, HW, C).
    if channels_last:
        pooled = _mean_f32(x_ref, axis=1, chunk=_SUBLANE_POOL_CHUNK)   # (B, C)
    else:
        pooled = _mean_f32(x_ref, axis=2, chunk=_LANE_POOL_CHUNK)      # (B, C)

    # FC1 (1x1 conv C -> R), SiLU, FC2 (1x1 conv R -> C), Sigmoid — all f32.
    h = jnp.dot(pooled, w1t_ref[...], preferred_element_type=jnp.float32) + b1_ref[...]
    h = h * jax.nn.sigmoid(h)
    s = jax.nn.sigmoid(
        jnp.dot(h, w2t_ref[...], preferred_element_type=jnp.float32) + b2_ref[...])

    # Gate the block in its native dtype (no f32 block inflation).
    gate = s.astype(o_ref.dtype)                                       # (B, C)
    if channels_last:
        o_ref[...] = x_ref[...] * gate[:, None, :]
    else:
        o_ref[...] = x_ref[...] * gate[:, :, None]


# ----------------------------------------------------------------------------
# Fallback: feature map too large for one VMEM-resident batch element.
# Pass 1 streams HW chunks to pool, tiny FCs run once, pass 2 streams to gate.
# ----------------------------------------------------------------------------
def _pool_sum_kernel(x_ref, psum_ref, *, hw_total, hw_blk):
    # x_ref: (1, C, hw_blk) chunk of one batch element; psum_ref: (1, 1, C) f32
    # accumulator, resident across the hw grid axis.
    h = pl.program_id(1)

    @pl.when(h == 0)
    def _():
        psum_ref[...] = jnp.zeros_like(psum_ref)

    x = x_ref[...].astype(jnp.float32)
    if hw_total % hw_blk != 0:
        # Mask the padded tail of the last chunk (padded input data is undefined).
        lane = jax.lax.broadcasted_iota(jnp.int32, x.shape, 2)
        x = jnp.where(h * hw_blk + lane < hw_total, x, 0.0)
    psum_ref[...] += jnp.sum(x, axis=2)[:, None, :]


def _gate_kernel(x_ref, g_ref, o_ref):
    # x_ref: (1, C, hw_blk); g_ref: (1, C, 1) gate in x's dtype.
    o_ref[...] = x_ref[...] * g_ref[...]


def _se_fallback(x_flat, w1t, b1_2d, w2t, b2_2d, budget_bytes, *, hw_block=None):
    N, C, HW = x_flat.shape
    itemsize = jnp.dtype(x_flat.dtype).itemsize

    if hw_block is not None:
        hw_blk = min(int(hw_block), HW)
        if hw_blk < HW:
            hw_blk = max(128, (hw_blk // 128) * 128)
    else:
        # Per HW lane the gate pass holds 4x native bytes (in+out, double
        # buffered) and the pool pass one f32 upcast column.
        per_lane = C * (4 * itemsize + 4)
        hw_fit = max(128, int((budget_bytes - (8 << 20)) // max(per_lane, 1)))
        hw_blk = HW if hw_fit >= HW else max(128, (hw_fit // 128) * 128)
    n_hw = pl.cdiv(HW, hw_blk)

    block_bytes = C * hw_blk * itemsize
    vmem_limit = int(min(max(4 * block_bytes + C * hw_blk * 4 + (4 << 20),
                             16 << 20), budget_bytes))

    psum = pl.pallas_call(
        functools.partial(_pool_sum_kernel, hw_total=HW, hw_blk=hw_blk),
        out_shape=jax.ShapeDtypeStruct((N, 1, C), jnp.float32),
        grid_spec=pltpu.PrefetchScalarGridSpec(
            num_scalar_prefetch=0,
            grid=(N, n_hw),
            in_specs=[pl.BlockSpec((1, C, hw_blk), lambda n, h: (n, 0, h))],
            out_specs=pl.BlockSpec((1, 1, C), lambda n, h: (n, 0, 0)),
        ),
        compiler_params=pltpu.CompilerParams(
            dimension_semantics=("parallel", "arbitrary"),
            vmem_limit_bytes=vmem_limit,
        ),
    )(x_flat)

    # Tiny 2-layer MLP on (N, C) pooled values — computed exactly once.
    pooled = psum.reshape(N, C) * (1.0 / float(HW))
    h = pooled @ w1t + b1_2d
    h = h * jax.nn.sigmoid(h)
    s = jax.nn.sigmoid(h @ w2t + b2_2d)                          # (N, C), f32
    gate = s.astype(x_flat.dtype).reshape(N, C, 1)

    out_flat = pl.pallas_call(
        _gate_kernel,
        out_shape=jax.ShapeDtypeStruct((N, C, HW), x_flat.dtype),
        grid_spec=pltpu.PrefetchScalarGridSpec(
            num_scalar_prefetch=0,
            grid=(N, n_hw),
            in_specs=[
                pl.BlockSpec((1, C, hw_blk), lambda n, h: (n, 0, h)),
                pl.BlockSpec((1, C, 1), lambda n, h: (n, 0, 0)),
            ],
            out_specs=pl.BlockSpec((1, C, hw_blk), lambda n, h: (n, 0, h)),
        ),
        compiler_params=pltpu.CompilerParams(
            dimension_semantics=("parallel", "parallel"),
            vmem_limit_bytes=vmem_limit,
        ),
        input_output_aliases={0: 0},
    )(x_flat, gate)
    return out_flat


# ----------------------------------------------------------------------------
# Public wrapper.
# ----------------------------------------------------------------------------
def squeeze_excitation(x, w1, b1, w2, b2, *, _force_fallback=False,
                       _fallback_hw_block=None):
    """x: (N, C, H, W).  w1: (R, C), b1: (R,), w2: (C, R), b2: (C,)."""
    N, C, H, W = x.shape
    R = w1.shape[0]
    HW = H * W

    # Prep weights once at trace time (pre-transposed: no in-kernel XLU
    # transpose), f32 so the tiny FCs run in full precision.
    w1t = jnp.transpose(w1).astype(jnp.float32)      # (C, R)
    w2t = jnp.transpose(w2).astype(jnp.float32)      # (R, C)
    b1_2d = b1.reshape(1, R).astype(jnp.float32)
    b2_2d = b2.reshape(1, C).astype(jnp.float32)

    itemsize = jnp.dtype(x.dtype).itemsize
    cap = _vmem_capacity_bytes()
    budget = max(min(int(cap * 0.85), cap - (8 << 20)), 24 << 20)
    target_block_bytes = cap // 6      # ~21 MiB on v5e/v6e, ~10.5 MiB on v7x
    num_cores = _num_tensorcores()

    per_batch_bytes = C * HW * itemsize
    fixed_bytes = ((C * R + R * C + R + C) * 4) * 2 + (4 << 20)  # weights x2 + headroom

    def _vmem_needed(b_blk, chunk):
        block_bytes = b_blk * per_batch_bytes
        pool_tmp = b_blk * C * min(HW, chunk) * 4    # chunked f32 pooling temp
        return 4 * block_bytes + pool_tmp + fixed_bytes

    if _force_fallback or _vmem_needed(1, _LANE_POOL_CHUNK) > budget:
        out_flat = _se_fallback(x.reshape(N, C, HW), w1t, b1_2d, w2t, b2_2d,
                                budget, hw_block=_fallback_hw_block)
        return out_flat.reshape(N, C, H, W)

    # Lane-dense layout choice: HW on lanes when it is already lane-dense,
    # otherwise put C on lanes (late EfficientNet stages: HW=49, C=1152, ...).
    channels_last = (HW % 128 != 0) and (C % 128 == 0)
    chunk = _SUBLANE_POOL_CHUNK if channels_last else _LANE_POOL_CHUNK

    b_blk = _pick_batch_block(N, per_batch_bytes, target_block_bytes, num_cores)
    while b_blk > 1 and _vmem_needed(b_blk, chunk) > budget:
        b_blk = (b_blk + 1) // 2
    grid = (pl.cdiv(N, b_blk),)
    vmem_limit = int(min(max(_vmem_needed(b_blk, chunk), 16 << 20), budget))

    # NOTE on padding correctness: if N % b_blk != 0, the padded batch rows of
    # the last block hold undefined data, but every op here (pool, the two FCs,
    # the gate multiply) is row-wise in the batch dim, so garbage stays in the
    # padded rows whose stores Pallas drops.  Do not add any cross-batch op to
    # the kernel without revisiting this.
    if channels_last:
        x_lay = jnp.transpose(x, (0, 2, 3, 1)).reshape(N, HW, C)
        x_spec = pl.BlockSpec((b_blk, HW, C), lambda n: (n, 0, 0))
        out_shape = jax.ShapeDtypeStruct((N, HW, C), x.dtype)
    else:
        x_lay = x.reshape(N, C, HW)
        x_spec = pl.BlockSpec((b_blk, C, HW), lambda n: (n, 0, 0))
        out_shape = jax.ShapeDtypeStruct((N, C, HW), x.dtype)

    out = pl.pallas_call(
        functools.partial(_se_kernel, channels_last=channels_last),
        out_shape=out_shape,
        grid_spec=pltpu.PrefetchScalarGridSpec(
            num_scalar_prefetch=0,
            grid=grid,
            in_specs=[
                x_spec,                                     # x block
                pl.BlockSpec((C, R), lambda n: (0, 0)),     # W1^T
                pl.BlockSpec((1, R), lambda n: (0, 0)),     # b1
                pl.BlockSpec((R, C), lambda n: (0, 0)),     # W2^T
                pl.BlockSpec((1, C), lambda n: (0, 0)),     # b2
            ],
            out_specs=x_spec,
        ),
        compiler_params=pltpu.CompilerParams(
            dimension_semantics=("parallel",),
            vmem_limit_bytes=vmem_limit,
        ),
        input_output_aliases={0: 0},   # donate x into the output
    )(x_lay, w1t, b1_2d, w2t, b2_2d)

    if channels_last:
        return jnp.transpose(out.reshape(N, H, W, C), (0, 3, 1, 2))
    return out.reshape(N, C, H, W)


# ----------------------------------------------------------------------------
# Reference + tests.
# ----------------------------------------------------------------------------
def _reference(x, w1, b1, w2, b2):
    pooled = jnp.mean(x.astype(jnp.float32), axis=(2, 3))        # (N, C)
    h = pooled @ w1.T.astype(jnp.float32) + b1
    h = h * jax.nn.sigmoid(h)
    s = jax.nn.sigmoid(h @ w2.T.astype(jnp.float32) + b2)        # (N, C)
    return x * s.astype(x.dtype)[:, :, None, None]


def _run_case(key, N, C, H, W, R, **kw):
    kx, k1, kb1, k2, kb2 = jax.random.split(key, 5)
    x = jax.random.normal(kx, (N, C, H, W), dtype=jnp.float32)
    w1 = jax.random.normal(k1, (R, C), dtype=jnp.float32) * 0.5
    b1 = jax.random.normal(kb1, (R,), dtype=jnp.float32) * 0.1
    w2 = jax.random.normal(k2, (C, R), dtype=jnp.float32) * 0.5
    b2 = jax.random.normal(kb2, (C,), dtype=jnp.float32) * 0.1

    out = squeeze_excitation(x, w1, b1, w2, b2, **kw)
    jax.block_until_ready(out)

    ref = _reference(x, w1, b1, w2, b2)
    assert out.shape == x.shape
    assert jnp.allclose(out, ref, atol=1e-4, rtol=1e-4), (
        f"mismatch vs reference for case N={N} C={C} H={H} W={W} kw={kw}")


if __name__ == "__main__":
    key = jax.random.PRNGKey(0)
    k0, k1, k2 = jax.random.split(key, 3)

    # Primary case: batch=2, in_channels=4, spatial=16x16, reduced_dim=2.
    _run_case(k0, N=2, C=4, H=16, W=16, R=2)

    # Lane-dense channels-last layout path (HW % 128 != 0, C % 128 == 0).
    _run_case(k1, N=2, C=128, H=7, W=7, R=8)

    # Streaming-fallback path (forced), exercising a masked partial HW chunk.
    _run_case(k2, N=2, C=8, H=10, W=20, R=4,
              _force_fallback=True, _fallback_hw_block=128)

    print("KERNEL_OK")
</pallas_src>

<mosaic_0001>
module attributes {stable_mosaic.version = 11 : i64} {
  func.func @_se_kernel(%arg0: i32, %arg1: memref<2x4x256xf32, #tpu.memory_space<vmem>>, %arg2: memref<4x2xf32, #tpu.memory_space<vmem>>, %arg3: memref<1x2xf32, #tpu.memory_space<vmem>>, %arg4: memref<2x4xf32, #tpu.memory_space<vmem>>, %arg5: memref<1x4xf32, #tpu.memory_space<vmem>>, %arg6: memref<2x4x256xf32, #tpu.memory_space<vmem>>) attributes {dimension_semantics = [#tpu.dimension_semantics<parallel>], iteration_bounds = array<i64: 1>, scalar_prefetch = 0 : i64, scratch_operands = 0 : i64, tpu.core_type = #tpu.core_type<tc>, window_params = [{transform_indices = @transform_0, window_bounds = array<i64: 2, 4, 256>}, {pipeline_mode = #tpu.pipeline_mode<synchronous>, transform_indices = @transform_1, window_bounds = array<i64: 4, 2>}, {pipeline_mode = #tpu.pipeline_mode<synchronous>, transform_indices = @transform_2, window_bounds = array<i64: 1, 2>}, {pipeline_mode = #tpu.pipeline_mode<synchronous>, transform_indices = @transform_3, window_bounds = array<i64: 2, 4>}, {pipeline_mode = #tpu.pipeline_mode<synchronous>, transform_indices = @transform_4, window_bounds = array<i64: 1, 4>}, {transform_indices = @transform_5, window_bounds = array<i64: 2, 4, 256>}]} {
    %cst = arith.constant 0.000000e+00 : f32
    %0 = vector.broadcast %cst : f32 to vector<2x4xf32>
    %c0 = arith.constant 0 : index
    %c0_0 = arith.constant 0 : index
    %c0_1 = arith.constant 0 : index
    %1 = vector.load %arg1[%c0, %c0_0, %c0_1] : memref<2x4x256xf32, #tpu.memory_space<vmem>>, vector<2x4x256xf32>
    %cst_2 = arith.constant dense<0.000000e+00> : vector<2x4xf32>
    %2 = vector.multi_reduction <add>, %1, %cst_2 [2] : vector<2x4x256xf32> to vector<2x4xf32>
    %3 = arith.addf %0, %2 : vector<2x4xf32>
    %cst_3 = arith.constant 3.906250e-03 : f32
    %4 = vector.broadcast %cst_3 : f32 to vector<2x4xf32>
    %5 = arith.mulf %3, %4 : vector<2x4xf32>
    %c0_4 = arith.constant 0 : index
    %c0_5 = arith.constant 0 : index
    %6 = vector.load %arg2[%c0_4, %c0_5] : memref<4x2xf32, #tpu.memory_space<vmem>>, vector<4x2xf32>
    %cst_6 = arith.constant dense<0.000000e+00> : vector<2x2xf32>
    %7 = tpu.matmul %5, %6, %cst_6 {dimension_numbers = #tpu.dot_dimension_numbers<[1], [0], [0], [1], [0, 0, 1, 1], [], []>} : vector<2x4xf32>, vector<4x2xf32>, vector<2x2xf32> -> vector<2x2xf32>
    %c0_7 = arith.constant 0 : index
    %c0_8 = arith.constant 0 : index
    %8 = vector.load %arg3[%c0_7, %c0_8] : memref<1x2xf32, #tpu.memory_space<vmem>>, vector<1x2xf32>
    %9 = vector.broadcast %8 : vector<1x2xf32> to vector<2x2xf32>
    %10 = arith.addf %7, %9 : vector<2x2xf32>
    %11 = arith.negf %10 : vector<2x2xf32>
    %12 = math.exp %11 : vector<2x2xf32>
    %cst_9 = arith.constant 1.000000e+00 : f32
    %13 = vector.broadcast %cst_9 : f32 to vector<2x2xf32>
    %14 = arith.addf %13, %12 : vector<2x2xf32>
    %15 = arith.divf %13, %14 : vector<2x2xf32>
    %16 = arith.mulf %10, %15 : vector<2x2xf32>
    %c0_10 = arith.constant 0 : index
    %c0_11 = arith.constant 0 : index
    %17 = vector.load %arg4[%c0_10, %c0_11] : memref<2x4xf32, #tpu.memory_space<vmem>>, vector<2x4xf32>
    %cst_12 = arith.constant dense<0.000000e+00> : vector<2x4xf32>
    %18 = tpu.matmul %16, %17, %cst_12 {dimension_numbers = #tpu.dot_dimension_numbers<[1], [0], [0], [1], [0, 0, 1, 1], [], []>} : vector<2x2xf32>, vector<2x4xf32>, vector<2x4xf32> -> vector<2x4xf32>
    %c0_13 = arith.constant 0 : index
    %c0_14 = arith.constant 0 : index
    %19 = vector.load %arg5[%c0_13, %c0_14] : memref<1x4xf32, #tpu.memory_space<vmem>>, vector<1x4xf32>
    %20 = vector.broadcast %19 : vector<1x4xf32> to vector<2x4xf32>
    %21 = arith.addf %18, %20 : vector<2x4xf32>
    %22 = arith.negf %21 : vector<2x4xf32>
    %23 = math.exp %22 : vector<2x4xf32>
    %cst_15 = arith.constant 1.000000e+00 : f32
    %24 = vector.broadcast %cst_15 : f32 to vector<2x4xf32>
    %25 = arith.addf %24, %23 : vector<2x4xf32>
    %26 = arith.divf %24, %25 : vector<2x4xf32>
    %c0_16 = arith.constant 0 : index
    %c0_17 = arith.constant 0 : index
    %c0_18 = arith.constant 0 : index
    %27 = vector.load %arg1[%c0_16, %c0_17, %c0_18] : memref<2x4x256xf32, #tpu.memory_space<vmem>>, vector<2x4x256xf32>
    %28 = vector.shape_cast %26 : vector<2x4xf32> to vector<2x4x1xf32>
    %29 = vector.broadcast %28 : vector<2x4x1xf32> to vector<2x4x256xf32>
    %30 = arith.mulf %27, %29 : vector<2x4x256xf32>
    %c0_19 = arith.constant 0 : index
    %c0_20 = arith.constant 0 : index
    %c0_21 = arith.constant 0 : index
    %31 = vector.load %arg6[%c0_19, %c0_20, %c0_21] : memref<2x4x256xf32, #tpu.memory_space<vmem>>, vector<2x4x256xf32>
    tpu.vector_store %arg6[%c0_19, %c0_20, %c0_21], %30 {strides = array<i32>} : memref<2x4x256xf32, #tpu.memory_space<vmem>>, vector<2x4x256xf32>,
    return
  }
  func.func @transform_0(%arg0: i32) -> (i32, i32, i32) {
    %c0_i32 = arith.constant 0 : i32
    %c0_i32_0 = arith.constant 0 : i32
    %c0_i32_1 = arith.constant 0 : i32
    return %arg0, %c0_i32, %c0_i32_0 : i32, i32, i32
  }
  func.func @transform_1(%arg0: i32) -> (i32, i32) {
    %c0_i32 = arith.constant 0 : i32
    %c0_i32_0 = arith.constant 0 : i32
    %c0_i32_1 = arith.constant 0 : i32
    return %c0_i32, %c0_i32_0 : i32, i32
  }
  func.func @transform_2(%arg0: i32) -> (i32, i32) {
    %c0_i32 = arith.constant 0 : i32
    %c0_i32_0 = arith.constant 0 : i32
    %c0_i32_1 = arith.constant 0 : i32
    return %c0_i32, %c0_i32_0 : i32, i32
  }
  func.func @transform_3(%arg0: i32) -> (i32, i32) {
    %c0_i32 = arith.constant 0 : i32
    %c0_i32_0 = arith.constant 0 : i32
    %c0_i32_1 = arith.constant 0 : i32
    return %c0_i32, %c0_i32_0 : i32, i32
  }
  func.func @transform_4(%arg0: i32) -> (i32, i32) {
    %c0_i32 = arith.constant 0 : i32
    %c0_i32_0 = arith.constant 0 : i32
    %c0_i32_1 = arith.constant 0 : i32
    return %c0_i32, %c0_i32_0 : i32, i32
  }
  func.func @transform_5(%arg0: i32) -> (i32, i32, i32) {
    %c0_i32 = arith.constant 0 : i32
    %c0_i32_0 = arith.constant 0 : i32
    %c0_i32_1 = arith.constant 0 : i32
    return %arg0, %c0_i32, %c0_i32_0 : i32, i32, i32
  }
}

</mosaic_0001>

<llo_original>
// kernel: tpu_custom_call.1
$region0: #{tpu_custom_call.1}
  #allocation0 [shape = 'u32[]', space=smem, size = 0x4, offset = 0x4, fixed_abs, tag = 'smem constant byte address 0x4 - core index']
  #allocation1 [shape = 'u32[72,128]{1,0:T(1,128)}', space=vmem, size = 0x9000, scoped, tag = 'internal scratch']
  %s0 = inlined_call_operand.hbm [shape: f32[2,4,256], index: 0, kind: input, shape index: {}, may-alias: {0,5}]
  %s1 = inlined_call_operand.vmem [shape: f32[4,2], index: 1, kind: input, shape index: {}]
  %s2 = inlined_call_operand.vmem [shape: f32[1,2], index: 2, kind: input, shape index: {}]
  %s3 = inlined_call_operand.vmem [shape: f32[2,4], index: 3, kind: input, shape index: {}]
  %s4 = inlined_call_operand.vmem [shape: f32[1,4], index: 4, kind: input, shape index: {}]
  %s5 = inlined_call_operand.hbm [shape: f32[2,4,256], index: 5, kind: output, shape index: {}, may-alias: {0,5}]
  %s6 = sld [smem:[#allocation0]]
  $region34: #{tpu_custom_call.1} parent=0
    _
  %s8 = ssub.s32 1, %s6
  %s9 = scalar_select 0, %s8, %s6
  $region1: #{tpu_custom_call.1} parent=0
    #allocation2 [shape = 'u8[8192]{0}', space=vmem, size = 0x2000, scoped, tag = 'input window, operand 0, single buffered']
    #allocation3 [shape = 's32[1]{0}', space=sflag, size = 0x4, scoped, tag = 'scoped memory for tpu_custom_call.1']
    #allocation4 [shape = 's32[1]{0}', space=sflag, size = 0x4, scoped, tag = 'scoped memory for tpu_custom_call.1']
    #allocation5 [shape = 'u8[8192]{0}', space=vmem, size = 0x2000, scoped, tag = 'output window, operand 0, single buffered']
    %10 = vsyncpa [#allocation3], 0
    %11 = vsyncpa [#allocation4], 0
    // Predicated region
    $region2: #{tpu_custom_call.1} parent=1 // pred_check
      _
    $region3: #{tpu_custom_call.1} parent=1 // pred_check_branch
      %13 = sbr.rel (0) target = $region5
    $region4: #{tpu_custom_call.1} parent=1 // pred_region
      %15 = vsyncadd [#allocation3], 0
      %s16 = sshll.u32 %s0, 4
      %s17 = int_to_ptr.hbm [resolvable:$true] %s16
      %s18 = sshll.u32 [#allocation2], 4
      %s19 = int_to_ptr.vmem [resolvable:$true] %s18
      %24 = dma.hbm_to_vmem [thread:$0]  %s17, 256, %s19, [#allocation3], 128, 128, 8
    $region5: #{tpu_custom_call.1} parent=1 // pred_fallthru
      _
    // Predicated region
    $region6: #{tpu_custom_call.1} parent=1 // pred_check
      _
    $region7: #{tpu_custom_call.1} parent=1 // pred_check_branch
      %26 = sbr.rel (0) target = $region9
    $region8: #{tpu_custom_call.1} parent=1 // pred_region
      _
    $region9: #{tpu_custom_call.1} parent=1 // pred_fallthru
      _
    // Predicated region
    $region10: #{tpu_custom_call.1} parent=1 // pred_check
      _
    $region11: #{tpu_custom_call.1} parent=1 // pred_check_branch
      %28 = sbr.rel (0) target = $region13
    $region12: #{tpu_custom_call.1} parent=1 // pred_region
      _
    $region13: #{tpu_custom_call.1} parent=1 // pred_fallthru
      _
    // Predicated region
    $region14: #{tpu_custom_call.1} parent=1 // pred_check
      _
    $region15: #{tpu_custom_call.1} parent=1 // pred_check_branch
      %30 = sbr.rel (0) target = $region17
    $region16: #{tpu_custom_call.1} parent=1 // pred_region
      _
    $region17: #{tpu_custom_call.1} parent=1 // pred_fallthru
      _
    // Predicated region
    $region18: #{tpu_custom_call.1} parent=1 // pred_check
      _
    $region19: #{tpu_custom_call.1} parent=1 // pred_check_branch
      %32 = sbr.rel (0) target = $region21
    $region20: #{tpu_custom_call.1} parent=1 // pred_region
      _
    $region21: #{tpu_custom_call.1} parent=1 // pred_fallthru
      _
    // Predicated region
    $region22: #{tpu_custom_call.1} parent=1 // pred_check
      _
    $region23: #{tpu_custom_call.1} parent=1 // pred_check_branch
      %34 = sbr.rel (0) target = $region25
    $region24: #{tpu_custom_call.1} parent=1 // pred_region
      %36 = dma.done [#allocation3], 256
    $region25: #{tpu_custom_call.1} parent=1 // pred_fallthru
      _
    %v37 = vld [vmem:[#allocation2] sm:$0xff]
    %v38 = vld [vmem:[#allocation2 + $0x8] sm:$0xff]
    %41 = vst [vmem:[#allocation1] ss:$2 sm:$0xff] %v37
    %v42 = vld.sshfl [vmem:[#allocation1] sm:$0xff pattern:$0x75316420]
    %v43 = vld.sshfl [vmem:[#allocation1 + $0x8] sm:$0xff pattern:$0x75316420]
    %s44 = scalar_lea.vmem [#allocation1], 16
    %45 = vst [vmem:[%s44] ss:$2 sm:$0xff] %v38
    %v46 = vld.sshfl [vmem:[#allocation1 + $0x10] sm:$0xff pattern:$0x75316420]
    %v47 = vld.sshfl [vmem:[#allocation1 + $0x18] sm:$0xff pattern:$0x75316420]
    %vm52 = vcmask 1043456
    %v53 = vsel %vm52, %v42, 0.0
    %v54 = vsel %vm52, %v43, 0.0
    %v55 = vadd.f32 %v53, %v54
    %56 = vadd.xlane.f32.xlu0 %v55
    %v57 = vpop.xlane.xlu0 %56
    %v58 = vsel %vm52, %v46, 0.0
    %v59 = vsel %vm52, %v47, 0.0
    %v60 = vadd.f32 %v58, %v59
    %61 = vadd.xlane.f32.xlu0 %v60
    %v62 = vpop.xlane.xlu0 %61
    %v63 = vadd.f32 %v57, 0.0
    %v64 = vadd.f32 %v62, 0.0
    %v65 = vmul.f32 %v63, 0.00390625
    %v66 = vmul.f32 %v64, 0.00390625
    %v67 = vld [vmem:[%s1] sm:$0xf]
    %v68 = vld [vmem:[%s2] sm:$0x1]
    %v70 = vperm.slane %v68, 0
    %v74 = vlaneseq
    %v75 = vand.u32 %v74, 127
    %v76 = vperm.slane %v65, %v75
    %v77 = vperm.slane %v66, %v75
    %vm78 = vcmask 1041409
    %v79 = vsel %vm78, %v77, %v76
    %vm80 = vcmask 31744
    %v81 = vsel %vm80, %v79, 0
    %v84 = vsel %vm52, %v67, 0
    %86 = vmatpush.msra.mxu0 0.0
    %87 = vmatpush.msra.mxu0 0.0
    %88 = vmatpush.msra.mxu0 0.0
    %89 = vmatpush.msra.mxu0 0.0
    %90 = vmatpush.msra.mxu0 0.0
    %91 = vmatpush.msra.mxu0 0.0
    %92 = vmatpush.msra.mxu0 0.0
    %93 = vmatpush.msra.mxu0 0.0
    %94 = vmatpush.msra.mxu0 0.0
    %95 = vmatpush.msra.mxu0 0.0
    %96 = vmatpush.msra.mxu0 0.0
    %97 = vmatpush.msra.mxu0 0.0
    %98 = vmatpush.msra.mxu0 0.0
    %99 = vmatpush.msra.mxu0 0.0
    %100 = vmatpush.msra.mxu0 0.0
    %101 = vmatpush.msra.mxu0 %v84
    %102 = vmatmul.f32.gmra.mxu0 %v81
    %v103 = vpop.f32.mrf.mxu0
    %v104 = vadd.f32 %v70, %v103
    %105 = vdwg.mxu0
    %v106 = vxor.u32 %v104, 2147483648
    %v107 = vmul.f32 %v106, 1.442695
    %v108 = vpow.pop %v107
    %v109 = vadd.f32 %v108, 1.0
    %v110 = vrcp.pop %v109
    %v111 = vmul.f32 %v109, %v110
    %v112 = vsub.f32 1.0, %v111
    %v113 = vmul.f32 %v110, %v112
    %v114 = vadd.f32 %v110, %v113
    %vm115 = vweird.f32 %v109
    %vm116 = vweird.f32 %v110
    %vm117 = vmor %vm115, %vm116
    %v118 = vsel %vm117, %v110, %v114
    %v119 = vand.u32 2147483647, %v109
    %vm120 = vcmp.eq.f32.partialorder %v119, 8.507059e+37
    %v121 = vand.u32 %v109, 2147483648
    %v122 = vor.u32 1.1754944e-38, %v121
    %v123 = vsel %vm120, %v122, %v118
    %v124 = vmul.f32 1.0, %v123
    %v125 = vmul.f32 %v104, %v124
    %v126 = vld [vmem:[%s3] sm:$0x3]
    %v127 = vld [vmem:[%s4] sm:$0x1]
    %v129 = vperm.slane %v127, 0
    %vm131 = vcmask 15360
    %v133 = vsel %vm131, %v125, 0
    %vm135 = vcmask 1041408
    %v137 = vsel %vm135, %v126, 0
    %139 = vmatpush.msra.mxu0 0.0
    %140 = vmatpush.msra.mxu0 0.0
    %141 = vmatpush.msra.mxu0 0.0
    %142 = vmatpush.msra.mxu0 0.0
    %143 = vmatpush.msra.mxu0 0.0
    %144 = vmatpush.msra.mxu0 0.0
    %145 = vmatpush.msra.mxu0 0.0
    %146 = vmatpush.msra.mxu0 0.0
    %147 = vmatpush.msra.mxu0 0.0
    %148 = vmatpush.msra.mxu0 0.0
    %149 = vmatpush.msra.mxu0 0.0
    %150 = vmatpush.msra.mxu0 0.0
    %151 = vmatpush.msra.mxu0 0.0
    %152 = vmatpush.msra.mxu0 0.0
    %153 = vmatpush.msra.mxu0 0.0
    %154 = vmatpush.msra.mxu0 %v137
    %155 = vmatmul.f32.gmra.mxu0 %v133
    %v156 = vpop.f32.mrf.mxu0
    %v157 = vadd.f32 %v129, %v156
    %158 = vdwg.mxu0
    %v159 = vxor.u32 %v157, 2147483648
    %v160 = vmul.f32 %v159, 1.442695
    %v161 = vpow.pop %v160
    %v162 = vadd.f32 %v161, 1.0
    %v163 = vrcp.pop %v162
    %v164 = vmul.f32 %v162, %v163
    %v165 = vsub.f32 1.0, %v164
    %v166 = vmul.f32 %v163, %v165
    %v167 = vadd.f32 %v163, %v166
    %vm168 = vweird.f32 %v162
    %vm169 = vweird.f32 %v163
    %vm170 = vmor %vm168, %vm169
    %v171 = vsel %vm170, %v163, %v167
    %v172 = vand.u32 2147483647, %v162
    %vm173 = vcmp.eq.f32.partialorder %v172, 8.507059e+37
    %v174 = vand.u32 %v162, 2147483648
    %v175 = vor.u32 1.1754944e-38, %v174
    %v176 = vsel %vm173, %v175, %v171
    %v177 = vmul.f32 1.0, %v176
    %v178 = vperm.slane %v177, 0
    %v179 = vlaneseq
    %v180 = vshrl.u32 %v179, 7
    %182 = vset.pattern.permute.xlu0 %v180
    %183 = vperm.xlu0 %182, %v178
    %v184 = vpop.permute.xlu0 %183
    %v185 = vperm.slane %v177, 1
    %v186 = vlaneseq
    %v187 = vshrl.u32 %v186, 7
    %189 = vset.pattern.permute.xlu0 %v187
    %190 = vperm.xlu0 %189, %v185
    %v191 = vpop.permute.xlu0 %190
    %v195 = vunpack.c.l.s4 839922192
    %v196 = vunpack.c.0.s8 %v195
    %v197 = vperm.slane %v184, %v196
    %v199 = vunpack.c.l.s4 839922192
    %v200 = vunpack.c.0.s8 %v199
    %v201 = vperm.slane %v191, %v200
    %v204 = vmul.f32 %v37, %v197
    %v205 = vmul.f32 %v38, %v201
    %206 = vst [vmem:[#allocation5] sm:$0xff] %v204
    %207 = vst [vmem:[#allocation5 + $0x8] sm:$0xff] %v205
    // Predicated region
    $region26: #{tpu_custom_call.1} parent=1 // pred_check
      _
    $region27: #{tpu_custom_call.1} parent=1 // pred_check_branch
      %209 = sbr.rel (0) target = $region29
    $region28: #{tpu_custom_call.1} parent=1 // pred_region
      %211 = vsyncadd [#allocation4], 0
      %s212 = sshll.u32 [#allocation5], 4
      %s213 = int_to_ptr.vmem [resolvable:$true] %s212
      %s214 = sshll.u32 %s5, 4
      %s215 = int_to_ptr.hbm [resolvable:$true] %s214
      %220 = dma.vmem_to_hbm [thread:$0]  %s213, 256, %s215, [#allocation4], 128, 128, 8
    $region29: #{tpu_custom_call.1} parent=1 // pred_fallthru
      _
    // Predicated region
    $region30: #{tpu_custom_call.1} parent=1 // pred_check
      _
    $region31: #{tpu_custom_call.1} parent=1 // pred_check_branch
      %222 = sbr.rel (0) target = $region33
    $region32: #{tpu_custom_call.1} parent=1 // pred_region
      %224 = dma.done [#allocation4], 256
    $region33: #{tpu_custom_call.1} parent=1 // pred_fallthru
      _
    %225 = vsyncpa [#allocation3], 1
    %226 = vsyncpa [#allocation4], 1

</llo_original>
